<compile_context>
chip_gen: v5e
topology: v5e:2x2
jax: 0.10.0
libtpu: 0.0.40
codegen_flags: <defaults>
</compile_context>

<pallas_src>
import jax
import jax.numpy as jnp
from jax.experimental import pallas as pl
from jax.experimental.pallas import tpu as pltpu

EPS = 1e-5

# 128-aligned lane offsets inside the packed small-parameter array.
_OFF_G0, _OFF_B0 = 0, 128          # width 8
_OFF_G1, _OFF_B1 = 256, 512        # width 256
_OFF_G2, _OFF_B2 = 768, 896        # width 128
_OFF_G3, _OFF_B3 = 1024, 1152      # width 16
_OFF_C4 = 1280                     # width 128 (only first 3 lanes nonzero)
_PACKED_W = 1408


def _bn_train_fused(x, gamma, beta):
    """Training-mode BatchNorm1d as a single scale/shift FMA per element (f32)."""
    mean = jnp.mean(x, axis=0, keepdims=True)
    mean_sq = jnp.mean(x * x, axis=0, keepdims=True)
    var = mean_sq - mean * mean                      # biased variance
    scale = gamma * jax.lax.rsqrt(var + EPS)         # rsqrt -> EUP slot
    shift = beta - mean * scale
    return x * scale + shift


def _relu(x):
    # my_relu: max(0, x) — scalar 0.0, no zeros-tensor broadcast per layer.
    return jnp.maximum(x, 0.0)


def mlp_kernel(x_ref, w1_ref, w2_ref, w3_ref, w4_ref, p_ref, out_ref):
    # Unpack the small per-feature params (static, 128-aligned slices, f32).
    g0 = p_ref[:, _OFF_G0:_OFF_G0 + 8]
    b0 = p_ref[:, _OFF_B0:_OFF_B0 + 8]
    g1 = p_ref[:, _OFF_G1:_OFF_G1 + 256]
    b1 = p_ref[:, _OFF_B1:_OFF_B1 + 256]
    g2 = p_ref[:, _OFF_G2:_OFF_G2 + 128]
    b2 = p_ref[:, _OFF_B2:_OFF_B2 + 128]
    g3 = p_ref[:, _OFF_G3:_OFF_G3 + 16]
    b3 = p_ref[:, _OFF_B3:_OFF_B3 + 16]
    c4 = p_ref[:, _OFF_C4:_OFF_C4 + 128]   # zero-padded past lane 3

    x = x_ref[...]                          # (B, 8) f32

    # bn0 (f32 stats), cast to bf16 only for the MXU operand.
    x1 = _bn_train_fused(x, g0, b0).astype(jnp.bfloat16)

    # linear1 -> bn1 -> relu   (linear bias dropped: cancels in batch-norm)
    z1 = jnp.dot(x1, w1_ref[...], preferred_element_type=jnp.float32)
    h1 = _relu(_bn_train_fused(z1, g1, b1)).astype(jnp.bfloat16)

    # linear2 -> bn2 -> relu
    z2 = jnp.dot(h1, w2_ref[...], preferred_element_type=jnp.float32)
    h2 = _relu(_bn_train_fused(z2, g2, b2)).astype(jnp.bfloat16)

    # linear3 -> bn3 -> relu
    z3 = jnp.dot(h2, w3_ref[...], preferred_element_type=jnp.float32)
    h3 = _relu(_bn_train_fused(z3, g3, b3)).astype(jnp.bfloat16)

    # linear4 (bias kept, f32) — lane-dense (B, 128) store; padded lanes zero.
    out_ref[...] = (
        jnp.dot(h3, w4_ref[...], preferred_element_type=jnp.float32) + c4
    )


def _pad_lanes(v, width):
    """Zero-pad a (1, d) row vector to (1, width)."""
    return jnp.pad(v, ((0, 0), (0, width - v.shape[1])))


def _pack_small_params(g0, b0, g1, b1, g2, b2, g3, b3, c4):
    parts = [
        _pad_lanes(g0, 128), _pad_lanes(b0, 128),     # offsets 0, 128
        _pad_lanes(g1, 256), _pad_lanes(b1, 256),     # offsets 256, 512
        _pad_lanes(g2, 128), _pad_lanes(b2, 128),     # offsets 768, 896
        _pad_lanes(g3, 128), _pad_lanes(b3, 128),     # offsets 1024, 1152
        _pad_lanes(c4, 128),                          # offset 1280
    ]
    packed = jnp.concatenate(parts, axis=1)
    assert packed.shape == (1, _PACKED_W)
    return packed


def _vmem_limit_bytes(B):
    """B-derived VMEM limit, capped per TPU generation (v7x has only 64 MiB)."""
    # f32 + bf16 activation temporaries per row across all layers ≈ 3.5 KiB,
    # plus bf16 weights / packed params / padded f32 output and headroom.
    act_bytes = B * 3584
    weight_bytes = (8 * 256 + 256 * 128 + 128 * 16 + 16 * 128) * 2 + _PACKED_W * 4
    out_bytes = B * 128 * 4
    want = act_bytes + weight_bytes + out_bytes + (8 << 20)     # + headroom
    cap = 48 << 20                                              # safe on v7x
    try:
        info = pltpu.get_tpu_info()
        phys = getattr(info, "vmem_capacity_bytes", None)
        if phys:
            cap = (phys * 3) // 4
    except Exception:
        pass
    return int(max(16 << 20, min(want, cap)))


def mlp_forward(x, params):
    """x: (B, 8) float32. params: the 16-tuple from init_params."""
    (g0, be0,
     w1, _c1, g1, be1,
     w2, _c2, g2, be2,
     w3, _c3, g3, be3,
     w4, c4) = params

    B = x.shape[0]
    # c1/c2/c3 intentionally unused (cancelled by training-mode BN).
    w4p = jnp.pad(w4, ((0, 0), (0, 128 - w4.shape[1])))   # (16, 128) lane-dense
    # One-time bf16 cast of all matmul weights (MXU-native on v5e/v6e/v7x).
    w1b = w1.astype(jnp.bfloat16)
    w2b = w2.astype(jnp.bfloat16)
    w3b = w3.astype(jnp.bfloat16)
    w4b = w4p.astype(jnp.bfloat16)
    packed = _pack_small_params(g0, be0, g1, be1, g2, be2, g3, be3, c4)

    flops = 2 * B * (8 * 256 + 256 * 128 + 128 * 16 + 16 * 128)
    transcendentals = 8 + 256 + 128 + 16            # one rsqrt per BN feature
    bytes_accessed = (
        x.size * 4
        + (w1b.size + w2b.size + w3b.size + w4b.size) * 2
        + packed.size * 4
        + B * 128 * 4
    )

    out_padded = pl.pallas_call(
        mlp_kernel,
        out_shape=jax.ShapeDtypeStruct((B, 128), jnp.float32),
        # Tiny problem -> single grid step, everything resident in VMEM.
        in_specs=[pl.BlockSpec(memory_space=pltpu.MemorySpace.VMEM)] * 6,
        out_specs=pl.BlockSpec(memory_space=pltpu.MemorySpace.VMEM),
        compiler_params=pltpu.CompilerParams(
            vmem_limit_bytes=_vmem_limit_bytes(B),
        ),
        cost_estimate=pl.CostEstimate(
            flops=flops,
            transcendentals=transcendentals,
            bytes_accessed=bytes_accessed,
        ),
    )(x, w1b, w2b, w3b, w4b, packed)
    return out_padded[:, :3]


def init_params(key):
    dims = [8, 256, 128, 16, 3]
    keys = jax.random.split(key, 16)
    ki = iter(range(16))

    def lin(in_d, out_d):
        # (in, out) layout = W^T relative to torch's nn.Linear weight
        w = 0.1 * jax.random.normal(keys[next(ki)], (in_d, out_d), jnp.float32)
        b = 0.1 * jax.random.normal(keys[next(ki)], (1, out_d), jnp.float32)
        return w, b

    def bn(d):
        gamma = 1.0 + 0.1 * jax.random.normal(keys[next(ki)], (1, d), jnp.float32)
        beta = 0.1 * jax.random.normal(keys[next(ki)], (1, d), jnp.float32)
        return gamma, beta

    g0, be0 = bn(dims[0])
    w1, c1 = lin(dims[0], dims[1]); g1, be1 = bn(dims[1])
    w2, c2 = lin(dims[1], dims[2]); g2, be2 = bn(dims[2])
    w3, c3 = lin(dims[2], dims[3]); g3, be3 = bn(dims[3])
    w4, c4 = lin(dims[3], dims[4])
    return (g0, be0,
            w1, c1, g1, be1,
            w2, c2, g2, be2,
            w3, c3, g3, be3,
            w4, c4)


def _bn_ref(x, gamma, beta):
    mean = jnp.mean(x, axis=0, keepdims=True)
    var = jnp.mean((x - mean) * (x - mean), axis=0, keepdims=True)
    return (x - mean) * jax.lax.rsqrt(var + EPS) * gamma + beta


def reference_forward(x, params):
    """Pure-JAX f32 reference with the ORIGINAL math (biases kept)."""
    (g0, be0,
     w1, c1, g1, be1,
     w2, c2, g2, be2,
     w3, c3, g3, be3,
     w4, c4) = params
    x1 = _bn_ref(x, g0, be0)
    h1 = _relu(_bn_ref(x1 @ w1 + c1, g1, be1))
    h2 = _relu(_bn_ref(h1 @ w2 + c2, g2, be2))
    h3 = _relu(_bn_ref(h2 @ w3 + c3, g3, be3))
    return h3 @ w4 + c4


if __name__ == "__main__":
    key = jax.random.PRNGKey(0)
    kx, kp = jax.random.split(key)

    B = 16
    x = jax.random.normal(kx, (B, 8), jnp.float32)
    params = init_params(kp)

    out = jax.jit(mlp_forward)(x, params)
    out = jax.block_until_ready(out)

    ref = reference_forward(x, params)
    assert out.shape == (B, 3), out.shape
    # Tolerance loosened vs. the pure-f32 version: matmul operands are bf16
    # (f32 accumulation / f32 BN statistics), per the performance review.
    assert jnp.allclose(out, ref, atol=5e-2, rtol=5e-2), (
        float(jnp.max(jnp.abs(out - ref)))
    )
    print("KERNEL_OK")
</pallas_src>

<mosaic_0001>
module attributes {stable_mosaic.version = 11 : i64} {
  func.func @mlp_kernel(%arg0: memref<16x8xf32, #tpu.memory_space<vmem>>, %arg1: memref<8x256xbf16, #tpu.memory_space<vmem>>, %arg2: memref<256x128xbf16, #tpu.memory_space<vmem>>, %arg3: memref<128x16xbf16, #tpu.memory_space<vmem>>, %arg4: memref<16x128xbf16, #tpu.memory_space<vmem>>, %arg5: memref<1x1408xf32, #tpu.memory_space<vmem>>, %arg6: memref<16x128xf32, #tpu.memory_space<vmem>>) attributes {dimension_semantics = [], scalar_prefetch = 0 : i64, scratch_operands = 0 : i64, tpu.core_type = #tpu.core_type<tc>} {
    %c0 = arith.constant 0 : index
    %c0_0 = arith.constant 0 : index
    %0 = vector.load %arg5[%c0, %c0_0] : memref<1x1408xf32, #tpu.memory_space<vmem>>, vector<1x8xf32>
    %c0_1 = arith.constant 0 : index
    %c128 = arith.constant 128 : index
    %1 = vector.load %arg5[%c0_1, %c128] : memref<1x1408xf32, #tpu.memory_space<vmem>>, vector<1x8xf32>
    %c0_2 = arith.constant 0 : index
    %c256 = arith.constant 256 : index
    %2 = vector.load %arg5[%c0_2, %c256] : memref<1x1408xf32, #tpu.memory_space<vmem>>, vector<1x256xf32>
    %c0_3 = arith.constant 0 : index
    %c512 = arith.constant 512 : index
    %3 = vector.load %arg5[%c0_3, %c512] : memref<1x1408xf32, #tpu.memory_space<vmem>>, vector<1x256xf32>
    %c0_4 = arith.constant 0 : index
    %c768 = arith.constant 768 : index
    %4 = vector.load %arg5[%c0_4, %c768] : memref<1x1408xf32, #tpu.memory_space<vmem>>, vector<1x128xf32>
    %c0_5 = arith.constant 0 : index
    %c896 = arith.constant 896 : index
    %5 = vector.load %arg5[%c0_5, %c896] : memref<1x1408xf32, #tpu.memory_space<vmem>>, vector<1x128xf32>
    %c0_6 = arith.constant 0 : index
    %c1024 = arith.constant 1024 : index
    %6 = vector.load %arg5[%c0_6, %c1024] : memref<1x1408xf32, #tpu.memory_space<vmem>>, vector<1x16xf32>
    %c0_7 = arith.constant 0 : index
    %c1152 = arith.constant 1152 : index
    %7 = vector.load %arg5[%c0_7, %c1152] : memref<1x1408xf32, #tpu.memory_space<vmem>>, vector<1x16xf32>
    %c0_8 = arith.constant 0 : index
    %c1280 = arith.constant 1280 : index
    %8 = vector.load %arg5[%c0_8, %c1280] : memref<1x1408xf32, #tpu.memory_space<vmem>>, vector<1x128xf32>
    %c0_9 = arith.constant 0 : index
    %c0_10 = arith.constant 0 : index
    %9 = vector.load %arg0[%c0_9, %c0_10] : memref<16x8xf32, #tpu.memory_space<vmem>>, vector<16x8xf32>
    %cst = arith.constant dense<0.000000e+00> : vector<8xf32>
    %10 = vector.multi_reduction <add>, %9, %cst [0] : vector<16x8xf32> to vector<8xf32>
    %11 = vector.shape_cast %10 : vector<8xf32> to vector<1x8xf32>
    %cst_11 = arith.constant 1.600000e+01 : f32
    %12 = vector.broadcast %cst_11 : f32 to vector<1x8xf32>
    %13 = arith.divf %11, %12 : vector<1x8xf32>
    %14 = arith.mulf %9, %9 : vector<16x8xf32>
    %cst_12 = arith.constant dense<0.000000e+00> : vector<8xf32>
    %15 = vector.multi_reduction <add>, %14, %cst_12 [0] : vector<16x8xf32> to vector<8xf32>
    %16 = vector.shape_cast %15 : vector<8xf32> to vector<1x8xf32>
    %cst_13 = arith.constant 1.600000e+01 : f32
    %17 = vector.broadcast %cst_13 : f32 to vector<1x8xf32>
    %18 = arith.divf %16, %17 : vector<1x8xf32>
    %19 = arith.mulf %13, %13 : vector<1x8xf32>
    %20 = arith.subf %18, %19 : vector<1x8xf32>
    %cst_14 = arith.constant 9.99999974E-6 : f32
    %21 = vector.broadcast %cst_14 : f32 to vector<1x8xf32>
    %22 = arith.addf %20, %21 : vector<1x8xf32>
    %23 = math.rsqrt %22 : vector<1x8xf32>
    %24 = arith.mulf %0, %23 : vector<1x8xf32>
    %25 = arith.mulf %13, %24 : vector<1x8xf32>
    %26 = arith.subf %1, %25 : vector<1x8xf32>
    %27 = vector.broadcast %24 : vector<1x8xf32> to vector<16x8xf32>
    %28 = arith.mulf %9, %27 : vector<16x8xf32>
    %29 = vector.broadcast %26 : vector<1x8xf32> to vector<16x8xf32>
    %30 = arith.addf %28, %29 : vector<16x8xf32>
    %31 = arith.truncf %30 : vector<16x8xf32> to vector<16x8xbf16>
    %c0_15 = arith.constant 0 : index
    %c0_16 = arith.constant 0 : index
    %32 = vector.load %arg1[%c0_15, %c0_16] : memref<8x256xbf16, #tpu.memory_space<vmem>>, vector<8x256xbf16>
    %cst_17 = arith.constant dense<0.000000e+00> : vector<16x256xf32>
    %33 = tpu.matmul %31, %32, %cst_17 {dimension_numbers = #tpu.dot_dimension_numbers<[1], [0], [0], [1], [0, 0, 1, 1], [], []>} : vector<16x8xbf16>, vector<8x256xbf16>, vector<16x256xf32> -> vector<16x256xf32>
    %cst_18 = arith.constant dense<0.000000e+00> : vector<256xf32>
    %34 = vector.multi_reduction <add>, %33, %cst_18 [0] : vector<16x256xf32> to vector<256xf32>
    %35 = vector.shape_cast %34 : vector<256xf32> to vector<1x256xf32>
    %cst_19 = arith.constant 1.600000e+01 : f32
    %36 = vector.broadcast %cst_19 : f32 to vector<1x256xf32>
    %37 = arith.divf %35, %36 : vector<1x256xf32>
    %38 = arith.mulf %33, %33 : vector<16x256xf32>
    %cst_20 = arith.constant dense<0.000000e+00> : vector<256xf32>
    %39 = vector.multi_reduction <add>, %38, %cst_20 [0] : vector<16x256xf32> to vector<256xf32>
    %40 = vector.shape_cast %39 : vector<256xf32> to vector<1x256xf32>
    %cst_21 = arith.constant 1.600000e+01 : f32
    %41 = vector.broadcast %cst_21 : f32 to vector<1x256xf32>
    %42 = arith.divf %40, %41 : vector<1x256xf32>
    %43 = arith.mulf %37, %37 : vector<1x256xf32>
    %44 = arith.subf %42, %43 : vector<1x256xf32>
    %cst_22 = arith.constant 9.99999974E-6 : f32
    %45 = vector.broadcast %cst_22 : f32 to vector<1x256xf32>
    %46 = arith.addf %44, %45 : vector<1x256xf32>
    %47 = math.rsqrt %46 : vector<1x256xf32>
    %48 = arith.mulf %2, %47 : vector<1x256xf32>
    %49 = arith.mulf %37, %48 : vector<1x256xf32>
    %50 = arith.subf %3, %49 : vector<1x256xf32>
    %51 = vector.broadcast %48 : vector<1x256xf32> to vector<16x256xf32>
    %52 = arith.mulf %33, %51 : vector<16x256xf32>
    %53 = vector.broadcast %50 : vector<1x256xf32> to vector<16x256xf32>
    %54 = arith.addf %52, %53 : vector<16x256xf32>
    %cst_23 = arith.constant 0.000000e+00 : f32
    %55 = vector.broadcast %cst_23 : f32 to vector<16x256xf32>
    %56 = arith.maximumf %54, %55 : vector<16x256xf32>
    %57 = arith.truncf %56 : vector<16x256xf32> to vector<16x256xbf16>
    %c0_24 = arith.constant 0 : index
    %c0_25 = arith.constant 0 : index
    %58 = vector.load %arg2[%c0_24, %c0_25] : memref<256x128xbf16, #tpu.memory_space<vmem>>, vector<256x128xbf16>
    %cst_26 = arith.constant dense<0.000000e+00> : vector<16x128xf32>
    %59 = tpu.matmul %57, %58, %cst_26 {dimension_numbers = #tpu.dot_dimension_numbers<[1], [0], [0], [1], [0, 0, 1, 1], [], []>} : vector<16x256xbf16>, vector<256x128xbf16>, vector<16x128xf32> -> vector<16x128xf32>
    %cst_27 = arith.constant dense<0.000000e+00> : vector<128xf32>
    %60 = vector.multi_reduction <add>, %59, %cst_27 [0] : vector<16x128xf32> to vector<128xf32>
    %61 = vector.shape_cast %60 : vector<128xf32> to vector<1x128xf32>
    %cst_28 = arith.constant 1.600000e+01 : f32
    %62 = vector.broadcast %cst_28 : f32 to vector<1x128xf32>
    %63 = arith.divf %61, %62 : vector<1x128xf32>
    %64 = arith.mulf %59, %59 : vector<16x128xf32>
    %cst_29 = arith.constant dense<0.000000e+00> : vector<128xf32>
    %65 = vector.multi_reduction <add>, %64, %cst_29 [0] : vector<16x128xf32> to vector<128xf32>
    %66 = vector.shape_cast %65 : vector<128xf32> to vector<1x128xf32>
    %cst_30 = arith.constant 1.600000e+01 : f32
    %67 = vector.broadcast %cst_30 : f32 to vector<1x128xf32>
    %68 = arith.divf %66, %67 : vector<1x128xf32>
    %69 = arith.mulf %63, %63 : vector<1x128xf32>
    %70 = arith.subf %68, %69 : vector<1x128xf32>
    %cst_31 = arith.constant 9.99999974E-6 : f32
    %71 = vector.broadcast %cst_31 : f32 to vector<1x128xf32>
    %72 = arith.addf %70, %71 : vector<1x128xf32>
    %73 = math.rsqrt %72 : vector<1x128xf32>
    %74 = arith.mulf %4, %73 : vector<1x128xf32>
    %75 = arith.mulf %63, %74 : vector<1x128xf32>
    %76 = arith.subf %5, %75 : vector<1x128xf32>
    %77 = vector.broadcast %74 : vector<1x128xf32> to vector<16x128xf32>
    %78 = arith.mulf %59, %77 : vector<16x128xf32>
    %79 = vector.broadcast %76 : vector<1x128xf32> to vector<16x128xf32>
    %80 = arith.addf %78, %79 : vector<16x128xf32>
    %cst_32 = arith.constant 0.000000e+00 : f32
    %81 = vector.broadcast %cst_32 : f32 to vector<16x128xf32>
    %82 = arith.maximumf %80, %81 : vector<16x128xf32>
    %83 = arith.truncf %82 : vector<16x128xf32> to vector<16x128xbf16>
    %c0_33 = arith.constant 0 : index
    %c0_34 = arith.constant 0 : index
    %84 = vector.load %arg3[%c0_33, %c0_34] : memref<128x16xbf16, #tpu.memory_space<vmem>>, vector<128x16xbf16>
    %cst_35 = arith.constant dense<0.000000e+00> : vector<16x16xf32>
    %85 = tpu.matmul %83, %84, %cst_35 {dimension_numbers = #tpu.dot_dimension_numbers<[1], [0], [0], [1], [0, 0, 1, 1], [], []>} : vector<16x128xbf16>, vector<128x16xbf16>, vector<16x16xf32> -> vector<16x16xf32>
    %cst_36 = arith.constant dense<0.000000e+00> : vector<16xf32>
    %86 = vector.multi_reduction <add>, %85, %cst_36 [0] : vector<16x16xf32> to vector<16xf32>
    %87 = vector.shape_cast %86 : vector<16xf32> to vector<1x16xf32>
    %cst_37 = arith.constant 1.600000e+01 : f32
    %88 = vector.broadcast %cst_37 : f32 to vector<1x16xf32>
    %89 = arith.divf %87, %88 : vector<1x16xf32>
    %90 = arith.mulf %85, %85 : vector<16x16xf32>
    %cst_38 = arith.constant dense<0.000000e+00> : vector<16xf32>
    %91 = vector.multi_reduction <add>, %90, %cst_38 [0] : vector<16x16xf32> to vector<16xf32>
    %92 = vector.shape_cast %91 : vector<16xf32> to vector<1x16xf32>
    %cst_39 = arith.constant 1.600000e+01 : f32
    %93 = vector.broadcast %cst_39 : f32 to vector<1x16xf32>
    %94 = arith.divf %92, %93 : vector<1x16xf32>
    %95 = arith.mulf %89, %89 : vector<1x16xf32>
    %96 = arith.subf %94, %95 : vector<1x16xf32>
    %cst_40 = arith.constant 9.99999974E-6 : f32
    %97 = vector.broadcast %cst_40 : f32 to vector<1x16xf32>
    %98 = arith.addf %96, %97 : vector<1x16xf32>
    %99 = math.rsqrt %98 : vector<1x16xf32>
    %100 = arith.mulf %6, %99 : vector<1x16xf32>
    %101 = arith.mulf %89, %100 : vector<1x16xf32>
    %102 = arith.subf %7, %101 : vector<1x16xf32>
    %103 = vector.broadcast %100 : vector<1x16xf32> to vector<16x16xf32>
    %104 = arith.mulf %85, %103 : vector<16x16xf32>
    %105 = vector.broadcast %102 : vector<1x16xf32> to vector<16x16xf32>
    %106 = arith.addf %104, %105 : vector<16x16xf32>
    %cst_41 = arith.constant 0.000000e+00 : f32
    %107 = vector.broadcast %cst_41 : f32 to vector<16x16xf32>
    %108 = arith.maximumf %106, %107 : vector<16x16xf32>
    %109 = arith.truncf %108 : vector<16x16xf32> to vector<16x16xbf16>
    %c0_42 = arith.constant 0 : index
    %c0_43 = arith.constant 0 : index
    %110 = vector.load %arg4[%c0_42, %c0_43] : memref<16x128xbf16, #tpu.memory_space<vmem>>, vector<16x128xbf16>
    %cst_44 = arith.constant dense<0.000000e+00> : vector<16x128xf32>
    %111 = tpu.matmul %109, %110, %cst_44 {dimension_numbers = #tpu.dot_dimension_numbers<[1], [0], [0], [1], [0, 0, 1, 1], [], []>} : vector<16x16xbf16>, vector<16x128xbf16>, vector<16x128xf32> -> vector<16x128xf32>
    %112 = vector.broadcast %8 : vector<1x128xf32> to vector<16x128xf32>
    %113 = arith.addf %111, %112 : vector<16x128xf32>
    %c0_45 = arith.constant 0 : index
    %c0_46 = arith.constant 0 : index
    %114 = vector.load %arg6[%c0_45, %c0_46] : memref<16x128xf32, #tpu.memory_space<vmem>>, vector<16x128xf32>
    tpu.vector_store %arg6[%c0_45, %c0_46], %113 {strides = array<i32>} : memref<16x128xf32, #tpu.memory_space<vmem>>, vector<16x128xf32>,
    return
  }
}

</mosaic_0001>

<llo_original>
// kernel: mlp_forward.1
$region0: #{mlp_forward.1}
  #allocation0 [shape = 'u32[]', space=smem, size = 0x4, offset = 0x4, fixed_abs, tag = 'smem constant byte address 0x4 - core index']
  #allocation1 [shape = 'u32[72,128]{1,0:T(1,128)}', space=vmem, size = 0x9000, scoped, tag = 'internal scratch']
  %s0 = inlined_call_operand.vmem [shape: f32[16,8], index: 0, kind: input, shape index: {}]
  %s1 = inlined_call_operand.vmem [shape: bf16[8,256], index: 1, kind: input, shape index: {}]
  %s2 = inlined_call_operand.vmem [shape: bf16[256,128], index: 2, kind: input, shape index: {}]
  %s3 = inlined_call_operand.vmem [shape: bf16[128,16], index: 3, kind: input, shape index: {}]
  %s4 = inlined_call_operand.vmem [shape: bf16[16,128], index: 4, kind: input, shape index: {}]
  %s5 = inlined_call_operand.vmem [shape: f32[1,1408], index: 5, kind: input, shape index: {}]
  %s6 = inlined_call_operand.vmem [shape: f32[16,128], index: 6, kind: output, shape index: {}]
  %s7 = sld [smem:[#allocation0]]
  $region34: #{mlp_forward.1} parent=0
    _
  %s9 = ssub.s32 1, %s7
  %s10 = scalar_select 0, %s9, %s7
  // Predicated region
  $region2: #{mlp_forward.1} parent=0 // pred_check
    _
  $region3: #{mlp_forward.1} parent=0 // pred_check_branch
    %12 = sbr.rel (0) target = $region5
  $region4: #{mlp_forward.1} parent=0 // pred_region
    _
  $region5: #{mlp_forward.1} parent=0 // pred_fallthru
    _
  // Predicated region
  $region6: #{mlp_forward.1} parent=0 // pred_check
    _
  $region7: #{mlp_forward.1} parent=0 // pred_check_branch
    %14 = sbr.rel (0) target = $region9
  $region8: #{mlp_forward.1} parent=0 // pred_region
    _
  $region9: #{mlp_forward.1} parent=0 // pred_fallthru
    _
  // Predicated region
  $region10: #{mlp_forward.1} parent=0 // pred_check
    _
  $region11: #{mlp_forward.1} parent=0 // pred_check_branch
    %16 = sbr.rel (0) target = $region13
  $region12: #{mlp_forward.1} parent=0 // pred_region
    _
  $region13: #{mlp_forward.1} parent=0 // pred_fallthru
    _
  // Predicated region
  $region14: #{mlp_forward.1} parent=0 // pred_check
    _
  $region15: #{mlp_forward.1} parent=0 // pred_check_branch
    %18 = sbr.rel (0) target = $region17
  $region16: #{mlp_forward.1} parent=0 // pred_region
    _
  $region17: #{mlp_forward.1} parent=0 // pred_fallthru
    _
  // Predicated region
  $region18: #{mlp_forward.1} parent=0 // pred_check
    _
  $region19: #{mlp_forward.1} parent=0 // pred_check_branch
    %20 = sbr.rel (0) target = $region21
  $region20: #{mlp_forward.1} parent=0 // pred_region
    _
  $region21: #{mlp_forward.1} parent=0 // pred_fallthru
    _
  // Predicated region
  $region22: #{mlp_forward.1} parent=0 // pred_check
    _
  $region23: #{mlp_forward.1} parent=0 // pred_check_branch
    %22 = sbr.rel (0) target = $region25
  $region24: #{mlp_forward.1} parent=0 // pred_region
    _
  $region25: #{mlp_forward.1} parent=0 // pred_fallthru
    _
  %v24 = vld [vmem:[%s5] sm:$0x1]
  %v25 = vld [vmem:[%s5 + $0x1] sm:$0x1]
  %v26 = vld [vmem:[%s5 + $0x2] sm:$0x3]
  %v27 = vld [vmem:[%s5 + $0x4] sm:$0x3]
  %v28 = vld [vmem:[%s5 + $0x6] sm:$0x1]
  %v29 = vld [vmem:[%s5 + $0x7] sm:$0x1]
  %v30 = vld [vmem:[%s5 + $0x8] sm:$0x1]
  %v31 = vld [vmem:[%s5 + $0x9] sm:$0x1]
  %v32 = vld [vmem:[%s5 + $0xa] sm:$0x1]
  %v33 = vld [vmem:[%s0] sm:$0xff]
  %v34 = vld [vmem:[%s0 + $0x8] sm:$0xff]
  %vm35 = vcmask 64512
  %v36 = vsel %vm35, %v33, 0.0
  %v37 = vsel %vm35, %v34, 0.0
  %v38 = vadd.f32 %v36, %v37
  %v39 = vrot.slane %v38, 4
  %v40 = vadd.f32 %v38, %v39
  %v41 = vrot.slane %v40, 2
  %v42 = vadd.f32 %v40, %v41
  %v43 = vrot.slane %v42, 1
  %v44 = vadd.f32 %v42, %v43
  %v45 = vrcp.pop 16.0
  %v46 = vmul.f32 16.0, %v45
  %v47 = vsub.f32 1.0, %v46
  %v48 = vmul.f32 %v45, %v47
  %v49 = vadd.f32 %v45, %v48
  %vm50 = vweird.f32 %v45
  %v51 = vsel %vm50, %v45, %v49
  %v52 = vmul.f32 %v44, %v51
  %v53 = vmul.f32 %v33, %v33
  %v54 = vmul.f32 %v34, %v34
  %v55 = vsel %vm35, %v53, 0.0
  %v56 = vsel %vm35, %v54, 0.0
  %v57 = vadd.f32 %v55, %v56
  %v58 = vrot.slane %v57, 4
  %v59 = vadd.f32 %v57, %v58
  %v60 = vrot.slane %v59, 2
  %v61 = vadd.f32 %v59, %v60
  %v62 = vrot.slane %v61, 1
  %v63 = vadd.f32 %v61, %v62
  %v64 = vmul.f32 %v63, %v51
  %v65 = vmul.f32 %v52, %v52
  %v66 = vsub.f32 %v64, %v65
  %v67 = vadd.f32 %v66, 1e-05
  %v68 = vrsqrt.pop %v67
  %v69 = vmul.f32 %v68, %v67
  %v70 = vmul.f32 %v69, %v68
  %v71 = vmul.f32 0.5, %v70
  %v72 = vsub.f32 1.5, %v71
  %v73 = vmul.f32 %v68, %v72
  %vm74 = vweird.f32 %v67
  %vm75 = vweird.f32 %v68
  %vm76 = vmor %vm74, %vm75
  %v77 = vsel %vm76, %v68, %v73
  %v78 = vmul.f32 %v24, %v77
  %v79 = vmul.f32 %v52, %v78
  %v80 = vsub.f32 %v25, %v79
  %v82 = vperm.slane %v78, 0
  %v84 = vmul.f32 %v33, %v82
  %v85 = vmul.f32 %v34, %v82
  %v87 = vperm.slane %v80, 0
  %v89 = vadd.f32 %v84, %v87
  %v90 = vadd.f32 %v85, %v87
  %v91 = vpack.c.bf16 %v90, %v89
  %v92 = vld [vmem:[%s1] sm:$0xff]
  %v94 = vunpack.c.l.b16 %v92
  %v95 = vunpack.c.h.b16 %v92
  %v96 = vpack.c.b16 %v94, %v94
  %v97 = vpack.c.b16 %v95, %v95
  %v99 = vsel %vm35, %v91, 0
  %vm101 = vcmask 1043456
  %v103 = vsel %vm101, %v96, 0
  %v106 = vsel %vm101, %v97, 0
  %108 = vmatpush.bf16.msra.mxu0 0
  %109 = vmatpush.bf16.msra.mxu0 0
  %110 = vmatpush.bf16.msra.mxu0 0
  %111 = vmatpush.bf16.msra.mxu0 0
  %112 = vmatpush.bf16.msra.mxu0 0
  %113 = vmatpush.bf16.msra.mxu0 0
  %114 = vmatpush.bf16.msra.mxu0 0
  %115 = vmatpush.bf16.msra.mxu0 %v103
  %116 = vmatmul.bf16.gmra.mxu0 %v99
  %v117 = vpop.f32.mrf.mxu0
  %v118 = vadd.f32 0.0, %v117
  %v119 = vpop.f32.mrf.mxu0
  %v120 = vadd.f32 0.0, %v119
  %121 = vdwg.mxu0
  %122 = vmatpush.bf16.msra.mxu0 0
  %123 = vmatpush.bf16.msra.mxu0 0
  %124 = vmatpush.bf16.msra.mxu0 0
  %125 = vmatpush.bf16.msra.mxu0 0
  %126 = vmatpush.bf16.msra.mxu0 0
  %127 = vmatpush.bf16.msra.mxu0 0
  %128 = vmatpush.bf16.msra.mxu0 0
  %129 = vmatpush.bf16.msra.mxu0 %v106
  %130 = vmatmul.bf16.gmra.mxu0 %v99
  %v131 = vpop.f32.mrf.mxu0
  %v132 = vadd.f32 0.0, %v131
  %v133 = vpop.f32.mrf.mxu0
  %v134 = vadd.f32 0.0, %v133
  %135 = vdwg.mxu0
  %v136 = vadd.f32 %v118, %v120
  %v137 = vrot.slane %v136, 4
  %v138 = vadd.f32 %v136, %v137
  %v139 = vrot.slane %v138, 2
  %v140 = vadd.f32 %v138, %v139
  %v141 = vrot.slane %v140, 1
  %v142 = vadd.f32 %v140, %v141
  %v143 = vadd.f32 %v132, %v134
  %v144 = vrot.slane %v143, 4
  %v145 = vadd.f32 %v143, %v144
  %v146 = vrot.slane %v145, 2
  %v147 = vadd.f32 %v145, %v146
  %v148 = vrot.slane %v147, 1
  %v149 = vadd.f32 %v147, %v148
  %v150 = vmul.f32 %v142, %v51
  %v151 = vmul.f32 %v149, %v51
  %v152 = vmul.f32 %v118, %v118
  %v153 = vmul.f32 %v132, %v132
  %v154 = vmul.f32 %v120, %v120
  %v155 = vmul.f32 %v134, %v134
  %v156 = vadd.f32 %v152, %v154
  %v157 = vrot.slane %v156, 4
  %v158 = vadd.f32 %v156, %v157
  %v159 = vrot.slane %v158, 2
  %v160 = vadd.f32 %v158, %v159
  %v161 = vrot.slane %v160, 1
  %v162 = vadd.f32 %v160, %v161
  %v163 = vadd.f32 %v153, %v155
  %v164 = vrot.slane %v163, 4
  %v165 = vadd.f32 %v163, %v164
  %v166 = vrot.slane %v165, 2
  %v167 = vadd.f32 %v165, %v166
  %v168 = vrot.slane %v167, 1
  %v169 = vadd.f32 %v167, %v168
  %v170 = vmul.f32 %v162, %v51
  %v171 = vmul.f32 %v169, %v51
  %v172 = vmul.f32 %v150, %v150
  %v173 = vmul.f32 %v151, %v151
  %v174 = vsub.f32 %v170, %v172
  %v175 = vsub.f32 %v171, %v173
  %v176 = vadd.f32 %v174, 1e-05
  %v177 = vadd.f32 %v175, 1e-05
  %v178 = vrsqrt.pop %v176
  %v179 = vmul.f32 %v178, %v176
  %v180 = vmul.f32 %v179, %v178
  %v181 = vmul.f32 0.5, %v180
  %v182 = vsub.f32 1.5, %v181
  %v183 = vmul.f32 %v178, %v182
  %vm184 = vweird.f32 %v176
  %vm185 = vweird.f32 %v178
  %vm186 = vmor %vm184, %vm185
  %v187 = vsel %vm186, %v178, %v183
  %v188 = vrsqrt.pop %v177
  %v189 = vmul.f32 %v188, %v177
  %v190 = vmul.f32 %v189, %v188
  %v191 = vmul.f32 0.5, %v190
  %v192 = vsub.f32 1.5, %v191
  %v193 = vmul.f32 %v188, %v192
  %vm194 = vweird.f32 %v177
  %vm195 = vweird.f32 %v188
  %vm196 = vmor %vm194, %vm195
  %v197 = vsel %vm196, %v188, %v193
  %v200 = vrot.slane %v197, 7
  %vm201 = vcmask 1040384
  %v202 = vsel %vm201, %v187, %v200
  %v204 = vmul.f32 %v26, %v202
  %v206 = vperm.slane %v204, 0
  %v207 = vperm.slane %v204, 1
  %v210 = vmul.f32 %v150, %v206
  %v211 = vmul.f32 %v151, %v207
  %v214 = vrot.slane %v211, 7
  %v215 = vsel %vm201, %v210, %v214
  %v217 = vsub.f32 %v27, %v215
  %v218 = vmul.f32 %v118, %v206
  %v219 = vmul.f32 %v132, %v207
  %v220 = vmul.f32 %v120, %v206
  %v221 = vmul.f32 %v134, %v207
  %v223 = vperm.slane %v217, 0
  %v224 = vperm.slane %v217, 1
  %v227 = vadd.f32 %v218, %v223
  %v228 = vadd.f32 %v219, %v224
  %v229 = vadd.f32 %v220, %v223
  %v230 = vadd.f32 %v221, %v224
  %v231 = vmax.f32 %v227, 0.0
  %v232 = vmax.f32 %v228, 0.0
  %v233 = vmax.f32 %v229, 0.0
  %v234 = vmax.f32 %v230, 0.0
  %v235 = vpack.c.bf16 %v233, %v231
  %v236 = vpack.c.bf16 %v234, %v232
  %v237 = vld [vmem:[%s2] sm:$0xf]
  %v238 = vld [vmem:[%s2 + $0x4] sm:$0xf]
  %v239 = vld [vmem:[%s2 + $0x8] sm:$0xf]
  %v240 = vld [vmem:[%s2 + $0xc] sm:$0xf]
  %v241 = vld [vmem:[%s2 + $0x10] sm:$0xf]
  %v242 = vld [vmem:[%s2 + $0x14] sm:$0xf]
  %v243 = vld [vmem:[%s2 + $0x18] sm:$0xf]
  %v244 = vld [vmem:[%s2 + $0x1c] sm:$0xf]
  %v245 = vld [vmem:[%s2 + $0x20] sm:$0xf]
  %v246 = vld [vmem:[%s2 + $0x24] sm:$0xf]
  %v247 = vld [vmem:[%s2 + $0x28] sm:$0xf]
  %v248 = vld [vmem:[%s2 + $0x2c] sm:$0xf]
  %v249 = vld [vmem:[%s2 + $0x30] sm:$0xf]
  %v250 = vld [vmem:[%s2 + $0x34] sm:$0xf]
  %v251 = vld [vmem:[%s2 + $0x38] sm:$0xf]
  %v252 = vld [vmem:[%s2 + $0x3c] sm:$0xf]
  %v253 = vld [vmem:[%s2 + $0x40] sm:$0xf]
  %v254 = vld [vmem:[%s2 + $0x44] sm:$0xf]
  %v255 = vld [vmem:[%s2 + $0x48] sm:$0xf]
  %v256 = vld [vmem:[%s2 + $0x4c] sm:$0xf]
  %v257 = vld [vmem:[%s2 + $0x50] sm:$0xf]
  %v258 = vld [vmem:[%s2 + $0x54] sm:$0xf]
  %v259 = vld [vmem:[%s2 + $0x58] sm:$0xf]
  %v260 = vld [vmem:[%s2 + $0x5c] sm:$0xf]
  %v261 = vld [vmem:[%s2 + $0x60] sm:$0xf]
  %v262 = vld [vmem:[%s2 + $0x64] sm:$0xf]
  %v263 = vld [vmem:[%s2 + $0x68] sm:$0xf]
  %v264 = vld [vmem:[%s2 + $0x6c] sm:$0xf]
  %v265 = vld [vmem:[%s2 + $0x70] sm:$0xf]
  %v266 = vld [vmem:[%s2 + $0x74] sm:$0xf]
  %v267 = vld [vmem:[%s2 + $0x78] sm:$0xf]
  %v268 = vld [vmem:[%s2 + $0x7c] sm:$0xf]
  %v301 = vunpack.c.l.b16 %v237
  %v302 = vunpack.c.l.b16 %v238
  %v303 = vunpack.c.l.b16 %v239
  %v304 = vunpack.c.l.b16 %v240
  %v305 = vunpack.c.l.b16 %v241
  %v306 = vunpack.c.l.b16 %v242
  %v307 = vunpack.c.l.b16 %v243
  %v308 = vunpack.c.l.b16 %v244
  %v309 = vunpack.c.l.b16 %v245
  %v310 = vunpack.c.l.b16 %v246
  %v311 = vunpack.c.l.b16 %v247
  %v312 = vunpack.c.l.b16 %v248
  %v313 = vunpack.c.l.b16 %v249
  %v314 = vunpack.c.l.b16 %v250
  %v315 = vunpack.c.l.b16 %v251
  %v316 = vunpack.c.l.b16 %v252
  %v317 = vunpack.c.l.b16 %v253
  %v318 = vunpack.c.l.b16 %v254
  %v319 = vunpack.c.l.b16 %v255
  %v320 = vunpack.c.l.b16 %v256
  %v321 = vunpack.c.l.b16 %v257
  %v322 = vunpack.c.l.b16 %v258
  %v323 = vunpack.c.l.b16 %v259
  %v324 = vunpack.c.l.b16 %v260
  %v325 = vunpack.c.l.b16 %v261
  %v326 = vunpack.c.l.b16 %v262
  %v327 = vunpack.c.l.b16 %v263
  %v328 = vunpack.c.l.b16 %v264
  %v329 = vunpack.c.l.b16 %v265
  %v330 = vunpack.c.l.b16 %v266
  %v331 = vunpack.c.l.b16 %v267
  %v332 = vunpack.c.l.b16 %v268
  %v333 = vpack.c.b16 %v302, %v301
  %v334 = vpack.c.b16 %v304, %v303
  %v335 = vpack.c.b16 %v306, %v305
  %v336 = vpack.c.b16 %v308, %v307
  %v337 = vpack.c.b16 %v310, %v309
  %v338 = vpack.c.b16 %v312, %v311
  %v339 = vpack.c.b16 %v314, %v313
  %v340 = vpack.c.b16 %v316, %v315
  %v341 = vpack.c.b16 %v318, %v317
  %v342 = vpack.c.b16 %v320, %v319
  %v343 = vpack.c.b16 %v322, %v321
  %v344 = vpack.c.b16 %v324, %v323
  %v345 = vpack.c.b16 %v326, %v325
  %v346 = vpack.c.b16 %v328, %v327
  %v347 = vpack.c.b16 %v330, %v329
  %v348 = vpack.c.b16 %v332, %v331
  %365 = vmatpush.bf16.msra.mxu0 %v340
  %366 = vmatpush.bf16.msra.mxu0 %v339
  %367 = vmatpush.bf16.msra.mxu0 %v338
  %368 = vmatpush.bf16.msra.mxu0 %v337
  %369 = vmatpush.bf16.msra.mxu0 %v336
  %370 = vmatpush.bf16.msra.mxu0 %v335
  %371 = vmatpush.bf16.msra.mxu0 %v334
  %372 = vmatpush.bf16.msra.mxu0 %v333
  %373 = vmatmul.bf16.gmra.mxu0 %v235
  %v374 = vpop.f32.mrf.mxu0
  %v375 = vadd.f32 0.0, %v374
  %v376 = vpop.f32.mrf.mxu0
  %v377 = vadd.f32 0.0, %v376
  %378 = vdwg.mxu0
  %379 = vmatpush.bf16.msra.mxu0 %v348
  %380 = vmatpush.bf16.msra.mxu0 %v347
  %381 = vmatpush.bf16.msra.mxu0 %v346
  %382 = vmatpush.bf16.msra.mxu0 %v345
  %383 = vmatpush.bf16.msra.mxu0 %v344
  %384 = vmatpush.bf16.msra.mxu0 %v343
  %385 = vmatpush.bf16.msra.mxu0 %v342
  %386 = vmatpush.bf16.msra.mxu0 %v341
  %387 = vmatmul.bf16.gmra.mxu0 %v236
  %v388 = vpop.f32.mrf.mxu0
  %v389 = vadd.f32 %v375, %v388
  %v390 = vpop.f32.mrf.mxu0
  %v391 = vadd.f32 %v377, %v390
  %392 = vdwg.mxu0
  %v393 = vadd.f32 %v389, %v391
  %v394 = vrot.slane %v393, 4
  %v395 = vadd.f32 %v393, %v394
  %v396 = vrot.slane %v395, 2
  %v397 = vadd.f32 %v395, %v396
  %v398 = vrot.slane %v397, 1
  %v399 = vadd.f32 %v397, %v398
  %v400 = vmul.f32 %v399, %v51
  %v401 = vmul.f32 %v389, %v389
  %v402 = vmul.f32 %v391, %v391
  %v403 = vadd.f32 %v401, %v402
  %v404 = vrot.slane %v403, 4
  %v405 = vadd.f32 %v403, %v404
  %v406 = vrot.slane %v405, 2
  %v407 = vadd.f32 %v405, %v406
  %v408 = vrot.slane %v407, 1
  %v409 = vadd.f32 %v407, %v408
  %v410 = vmul.f32 %v409, %v51
  %v411 = vmul.f32 %v400, %v400
  %v412 = vsub.f32 %v410, %v411
  %v413 = vadd.f32 %v412, 1e-05
  %v414 = vrsqrt.pop %v413
  %v415 = vmul.f32 %v414, %v413
  %v416 = vmul.f32 %v415, %v414
  %v417 = vmul.f32 0.5, %v416
  %v418 = vsub.f32 1.5, %v417
  %v419 = vmul.f32 %v414, %v418
  %vm420 = vweird.f32 %v413
  %vm421 = vweird.f32 %v414
  %vm422 = vmor %vm420, %vm421
  %v423 = vsel %vm422, %v414, %v419
  %v424 = vmul.f32 %v28, %v423
  %v425 = vmul.f32 %v400, %v424
  %v426 = vsub.f32 %v29, %v425
  %v428 = vperm.slane %v424, 0
  %v430 = vmul.f32 %v389, %v428
  %v431 = vmul.f32 %v391, %v428
  %v433 = vperm.slane %v426, 0
  %v435 = vadd.f32 %v430, %v433
  %v436 = vadd.f32 %v431, %v433
  %v437 = vmax.f32 %v435, 0.0
  %v438 = vmax.f32 %v436, 0.0
  %v439 = vpack.c.bf16 %v438, %v437
  %v440 = vld [vmem:[%s3] sm:$0xf]
  %v441 = vld [vmem:[%s3 + $0x4] sm:$0xf]
  %v442 = vld [vmem:[%s3 + $0x8] sm:$0xf]
  %v443 = vld [vmem:[%s3 + $0xc] sm:$0xf]
  %v444 = vld [vmem:[%s3 + $0x10] sm:$0xf]
  %v445 = vld [vmem:[%s3 + $0x14] sm:$0xf]
  %v446 = vld [vmem:[%s3 + $0x18] sm:$0xf]
  %v447 = vld [vmem:[%s3 + $0x1c] sm:$0xf]
  %v448 = vld [vmem:[%s3 + $0x20] sm:$0xf]
  %v449 = vld [vmem:[%s3 + $0x24] sm:$0xf]
  %v450 = vld [vmem:[%s3 + $0x28] sm:$0xf]
  %v451 = vld [vmem:[%s3 + $0x2c] sm:$0xf]
  %v452 = vld [vmem:[%s3 + $0x30] sm:$0xf]
  %v453 = vld [vmem:[%s3 + $0x34] sm:$0xf]
  %v454 = vld [vmem:[%s3 + $0x38] sm:$0xf]
  %v455 = vld [vmem:[%s3 + $0x3c] sm:$0xf]
  %v472 = vunpack.c.l.b16 %v440
  %v473 = vunpack.c.l.b16 %v441
  %v474 = vunpack.c.l.b16 %v442
  %v475 = vunpack.c.l.b16 %v443
  %v476 = vunpack.c.l.b16 %v444
  %v477 = vunpack.c.l.b16 %v445
  %v478 = vunpack.c.l.b16 %v446
  %v479 = vunpack.c.l.b16 %v447
  %v480 = vunpack.c.l.b16 %v448
  %v481 = vunpack.c.l.b16 %v449
  %v482 = vunpack.c.l.b16 %v450
  %v483 = vunpack.c.l.b16 %v451
  %v484 = vunpack.c.l.b16 %v452
  %v485 = vunpack.c.l.b16 %v453
  %v486 = vunpack.c.l.b16 %v454
  %v487 = vunpack.c.l.b16 %v455
  %v488 = vpack.c.b16 %v473, %v472
  %v489 = vpack.c.b16 %v475, %v474
  %v490 = vpack.c.b16 %v477, %v476
  %v491 = vpack.c.b16 %v479, %v478
  %v492 = vpack.c.b16 %v481, %v480
  %v493 = vpack.c.b16 %v483, %v482
  %v494 = vpack.c.b16 %v485, %v484
  %v495 = vpack.c.b16 %v487, %v486
  %504 = vmatpush.bf16.msra.mxu0 %v495
  %505 = vmatpush.bf16.msra.mxu0 %v494
  %506 = vmatpush.bf16.msra.mxu0 %v493
  %507 = vmatpush.bf16.msra.mxu0 %v492
  %508 = vmatpush.bf16.msra.mxu0 %v491
  %509 = vmatpush.bf16.msra.mxu0 %v490
  %510 = vmatpush.bf16.msra.mxu0 %v489
  %511 = vmatpush.bf16.msra.mxu0 %v488
  %512 = vmatmul.bf16.gmra.mxu0 %v439
  %v513 = vpop.f32.mrf.mxu0
  %v514 = vadd.f32 0.0, %v513
  %v515 = vpop.f32.mrf.mxu0
  %v516 = vadd.f32 0.0, %v515
  %517 = vdwg.mxu0
  %vm518 = vcmask 130048
  %v519 = vsel %vm518, %v514, 0.0
  %v520 = vsel %vm518, %v516, 0.0
  %v521 = vadd.f32 %v519, %v520
  %v522 = vrot.slane %v521, 4
  %v523 = vadd.f32 %v521, %v522
  %v524 = vrot.slane %v523, 2
  %v525 = vadd.f32 %v523, %v524
  %v526 = vrot.slane %v525, 1
  %v527 = vadd.f32 %v525, %v526
  %v528 = vmul.f32 %v527, %v51
  %v529 = vmul.f32 %v514, %v514
  %v530 = vmul.f32 %v516, %v516
  %v531 = vsel %vm518, %v529, 0.0
  %v532 = vsel %vm518, %v530, 0.0
  %v533 = vadd.f32 %v531, %v532
  %v534 = vrot.slane %v533, 4
  %v535 = vadd.f32 %v533, %v534
  %v536 = vrot.slane %v535, 2
  %v537 = vadd.f32 %v535, %v536
  %v538 = vrot.slane %v537, 1
  %v539 = vadd.f32 %v537, %v538
  %v540 = vmul.f32 %v539, %v51
  %v541 = vmul.f32 %v528, %v528
  %v542 = vsub.f32 %v540, %v541
  %v543 = vadd.f32 %v542, 1e-05
  %v544 = vrsqrt.pop %v543
  %v545 = vmul.f32 %v544, %v543
  %v546 = vmul.f32 %v545, %v544
  %v547 = vmul.f32 0.5, %v546
  %v548 = vsub.f32 1.5, %v547
  %v549 = vmul.f32 %v544, %v548
  %vm550 = vweird.f32 %v543
  %vm551 = vweird.f32 %v544
  %vm552 = vmor %vm550, %vm551
  %v553 = vsel %vm552, %v544, %v549
  %v554 = vmul.f32 %v30, %v553
  %v555 = vmul.f32 %v528, %v554
  %v556 = vsub.f32 %v31, %v555
  %v558 = vperm.slane %v554, 0
  %v560 = vmul.f32 %v514, %v558
  %v561 = vmul.f32 %v516, %v558
  %v563 = vperm.slane %v556, 0
  %v565 = vadd.f32 %v560, %v563
  %v566 = vadd.f32 %v561, %v563
  %v567 = vmax.f32 %v565, 0.0
  %v568 = vmax.f32 %v566, 0.0
  %v569 = vpack.c.bf16 %v568, %v567
  %v570 = vld [vmem:[%s4] sm:$0xf]
  %v571 = vld [vmem:[%s4 + $0x4] sm:$0xf]
  %v573 = vperm.slane %v32, 0
  %v577 = vunpack.c.l.b16 %v570
  %v578 = vunpack.c.l.b16 %v571
  %v579 = vpack.c.b16 %v578, %v577
  %v582 = vsel %vm518, %v569, 0
  %584 = vmatpush.bf16.msra.mxu0 0
  %585 = vmatpush.bf16.msra.mxu0 0
  %586 = vmatpush.bf16.msra.mxu0 0
  %587 = vmatpush.bf16.msra.mxu0 0
  %588 = vmatpush.bf16.msra.mxu0 0
  %589 = vmatpush.bf16.msra.mxu0 0
  %590 = vmatpush.bf16.msra.mxu0 0
  %591 = vmatpush.bf16.msra.mxu0 %v579
  %592 = vmatmul.bf16.gmra.mxu0 %v582
  %v593 = vpop.f32.mrf.mxu0
  %v594 = vadd.f32 %v573, %v593
  %v595 = vpop.f32.mrf.mxu0
  %v596 = vadd.f32 %v573, %v595
  %597 = vdwg.mxu0
  %598 = vst [vmem:[%s6] sm:$0xff] %v594
  %599 = vst [vmem:[%s6 + $0x8] sm:$0xff] %v596
  // Predicated region
  $region26: #{mlp_forward.1} parent=0 // pred_check
    _
  $region27: #{mlp_forward.1} parent=0 // pred_check_branch
    %601 = sbr.rel (0) target = $region29
  $region28: #{mlp_forward.1} parent=0 // pred_region
    _
  $region29: #{mlp_forward.1} parent=0 // pred_fallthru
    _
  // Predicated region
  $region30: #{mlp_forward.1} parent=0 // pred_check
    _
  $region31: #{mlp_forward.1} parent=0 // pred_check_branch
    %603 = sbr.rel (0) target = $region33
  $region32: #{mlp_forward.1} parent=0 // pred_region
    _
  $region33: #{mlp_forward.1} parent=0 // pred_fallthru
    _

</llo_original>
